<compile_context>
chip_gen: v7x
topology: tpu7x:2x2x1
jax: 0.10.0
libtpu: 0.0.40
codegen_flags: <defaults>
</compile_context>

<pallas_src>
import jax
import jax.numpy as jnp
from jax import lax
from jax.experimental import pallas as pl
from jax.experimental.pallas import tpu as pltpu


def gate_kernel(x_ref, w_ref, b_ref, o_ref):
    # x_ref: (tm, dim)   row tile of the input
    # w_ref: (tn, dim)   rows of W (out_features slice), PyTorch layout
    # b_ref: (1, tn)     bias slice, broadcast over rows
    # o_ref: (tm, tn)    output tile
    acc = lax.dot_general(
        x_ref[...], w_ref[...],
        dimension_numbers=(((1,), (1,)), ((), ())),  # contract features vs in_features (x @ W^T)
        preferred_element_type=jnp.float32,          # f32 accumulation on the MXU
    )
    o_ref[...] = (acc + b_ref[...].astype(jnp.float32)).astype(o_ref.dtype)


def _choose_tiles(n_rows, dim, itemsize, budget_bytes):
    """Largest (tm, tn) whose double-buffered VMEM footprint fits the budget."""
    row_cands = [n_rows] if n_rows <= 256 else [256, 128, 64, 32, 16, 8]
    col_cands = [dim] if dim <= 512 else [512, 256, 128]

    def footprint(tm, tn):
        # 2x for double-buffering: x tile + W tile + bias tile + output tile.
        return 2 * itemsize * (tm * dim + tn * dim + tn + tm * tn)

    for tm in row_cands:
        for tn in col_cands:
            if footprint(tm, tn) <= budget_bytes:
                return tm, tn
    return row_cands[-1], col_cands[-1]


def gate_forward(x, weight, bias, *, compute_dtype=None):
    """y = x @ weight.T + bias  (PyTorch nn.Linear semantics).

    x:      (N, dim)
    weight: (dim, dim)  PyTorch layout (out_features, in_features); NOT transposed here
    bias:   (dim,)
    compute_dtype: optional (e.g. jnp.bfloat16) cast of x/weight for the MXU;
                   accumulation stays f32, output keeps x's original dtype.
    """
    n_rows, dim = x.shape
    assert weight.shape == (dim, dim)
    assert bias.shape == (dim,)

    out_dtype = x.dtype
    if compute_dtype is not None:
        # In a real model, cast the weight once at init rather than per call.
        x = x.astype(compute_dtype)
        weight = weight.astype(compute_dtype)

    b2 = bias.astype(weight.dtype).reshape(1, dim)
    itemsize = jnp.dtype(x.dtype).itemsize

    # Keep the double-buffered working set comfortably under v7x's 64 MiB VMEM.
    budget_bytes = 40 * 1024 * 1024
    tm, tn = _choose_tiles(n_rows, dim, itemsize, budget_bytes)

    # Column tiles j outer, row tiles i inner -> weight block index (j, 0) is
    # constant across consecutive steps, so Pallas skips re-DMA of the weight.
    grid = (pl.cdiv(dim, tn), pl.cdiv(n_rows, tm))

    cost = pl.CostEstimate(
        flops=2 * n_rows * dim * dim,
        transcendentals=0,
        bytes_accessed=(2 * n_rows * dim + dim * dim + dim) * itemsize,
    )

    return pl.pallas_call(
        gate_kernel,
        out_shape=jax.ShapeDtypeStruct((n_rows, dim), out_dtype),
        grid_spec=pltpu.PrefetchScalarGridSpec(
            num_scalar_prefetch=0,
            grid=grid,
            in_specs=[
                # x row tile: full (lane-dense) feature width, varies with i only.
                pl.BlockSpec((tm, dim), lambda j, i: (i, 0)),
                # Weight slab: depends on j only -> VMEM-resident across row tiles.
                pl.BlockSpec((tn, dim), lambda j, i: (j, 0)),
                # Bias slice for this output-column tile.
                pl.BlockSpec((1, tn), lambda j, i: (0, j)),
            ],
            out_specs=pl.BlockSpec((tm, tn), lambda j, i: (i, j)),
        ),
        compiler_params=pltpu.CompilerParams(
            # No reduction axis: both grid axes are independent -> megacore
            # sharding across v7x's two TensorCores.
            dimension_semantics=("parallel", "parallel"),
            # Above the 16/32 MiB scoped defaults, below v7x's 64 MiB physical.
            vmem_limit_bytes=48 * 1024 * 1024,
        ),
        cost_estimate=cost,
    )(x, weight, b2)


if __name__ == "__main__":
    key = jax.random.PRNGKey(0)
    kx, kw, kb = jax.random.split(key, 3)

    # Small shapes, but lane-dense (last dim a multiple of 128) so the output
    # path uses full vst stores instead of masked partial stores.
    N, dim = 16, 128

    x = jax.random.normal(kx, (N, dim), dtype=jnp.float32)

    # nn.Linear default init: U(-1/sqrt(dim), 1/sqrt(dim)) for weight and bias.
    bound = 1.0 / (dim ** 0.5)
    weight = jax.random.uniform(kw, (dim, dim), minval=-bound, maxval=bound,
                                dtype=jnp.float32)
    bias = jax.random.uniform(kb, (dim,), minval=-bound, maxval=bound,
                              dtype=jnp.float32)

    y = gate_forward(x, weight, bias)
    y = jax.block_until_ready(y)

    # Reference in plain JAX (x.clone() is a no-op for the math).
    y_ref = jnp.dot(x, weight.T, precision=jax.lax.Precision.HIGHEST) + bias
    assert y.shape == (N, dim) and y.dtype == x.dtype
    assert jnp.allclose(y, y_ref, atol=1e-4, rtol=1e-4), "mismatch vs reference"

    print("KERNEL_OK")
</pallas_src>

<mosaic_0001>
module attributes {stable_mosaic.version = 11 : i64} {
  func.func @gate_kernel(%arg0: i32, %arg1: i32, %arg2: memref<16x128xf32, #tpu.memory_space<vmem>>, %arg3: memref<128x128xf32, #tpu.memory_space<vmem>>, %arg4: memref<1x128xf32, #tpu.memory_space<vmem>>, %arg5: memref<16x128xf32, #tpu.memory_space<vmem>>) attributes {dimension_semantics = [#tpu.dimension_semantics<parallel>, #tpu.dimension_semantics<parallel>], iteration_bounds = array<i64: 1, 1>, scalar_prefetch = 0 : i64, scratch_operands = 0 : i64, tpu.core_type = #tpu.core_type<tc>, window_params = [{transform_indices = @transform_0, window_bounds = array<i64: 16, 128>}, {transform_indices = @transform_1, window_bounds = array<i64: 128, 128>}, {transform_indices = @transform_2, window_bounds = array<i64: 1, 128>}, {transform_indices = @transform_3, window_bounds = array<i64: 16, 128>}]} {
    %c0 = arith.constant 0 : index
    %c0_0 = arith.constant 0 : index
    %0 = vector.load %arg2[%c0, %c0_0] : memref<16x128xf32, #tpu.memory_space<vmem>>, vector<16x128xf32>
    %c0_1 = arith.constant 0 : index
    %c0_2 = arith.constant 0 : index
    %1 = vector.load %arg3[%c0_1, %c0_2] : memref<128x128xf32, #tpu.memory_space<vmem>>, vector<128x128xf32>
    %cst = arith.constant dense<0.000000e+00> : vector<16x128xf32>
    %2 = tpu.matmul %0, %1, %cst {dimension_numbers = #tpu.dot_dimension_numbers<[1], [1], [0], [0], [0, 0, 1, 0], [], []>} : vector<16x128xf32>, vector<128x128xf32>, vector<16x128xf32> -> vector<16x128xf32>
    %c0_3 = arith.constant 0 : index
    %c0_4 = arith.constant 0 : index
    %3 = vector.load %arg4[%c0_3, %c0_4] : memref<1x128xf32, #tpu.memory_space<vmem>>, vector<1x128xf32>
    %4 = vector.broadcast %3 : vector<1x128xf32> to vector<16x128xf32>
    %5 = arith.addf %2, %4 : vector<16x128xf32>
    %c0_5 = arith.constant 0 : index
    %c0_6 = arith.constant 0 : index
    %6 = vector.load %arg5[%c0_5, %c0_6] : memref<16x128xf32, #tpu.memory_space<vmem>>, vector<16x128xf32>
    tpu.vector_store %arg5[%c0_5, %c0_6], %5 {strides = array<i32>} : memref<16x128xf32, #tpu.memory_space<vmem>>, vector<16x128xf32>,
    return
  }
  func.func @transform_0(%arg0: i32, %arg1: i32) -> (i32, i32) {
    %c0_i32 = arith.constant 0 : i32
    %c0_i32_0 = arith.constant 0 : i32
    return %arg1, %c0_i32 : i32, i32
  }
  func.func @transform_1(%arg0: i32, %arg1: i32) -> (i32, i32) {
    %c0_i32 = arith.constant 0 : i32
    %c0_i32_0 = arith.constant 0 : i32
    return %arg0, %c0_i32 : i32, i32
  }
  func.func @transform_2(%arg0: i32, %arg1: i32) -> (i32, i32) {
    %c0_i32 = arith.constant 0 : i32
    %c0_i32_0 = arith.constant 0 : i32
    return %c0_i32, %arg0 : i32, i32
  }
  func.func @transform_3(%arg0: i32, %arg1: i32) -> (i32, i32) {
    %c0_i32 = arith.constant 0 : i32
    return %arg1, %arg0 : i32, i32
  }
}

</mosaic_0001>

<llo_original>
// kernel: tpu_custom_call.1
$region0: #{tpu_custom_call.1}
  #allocation0 [shape = 'u32[]', space=smem, size = 0x4, offset = 0x4, fixed_abs, tag = 'smem constant byte address 0x4 - core index']
  #allocation1 [shape = 'u32[144,128]{1,0:T(1,128)}', space=vmem, size = 0x12000, scoped, tag = 'internal scratch']
  %s0 = inlined_call_operand.hbm [shape: f32[16,128], index: 0, kind: input, shape index: {}]
  %s1 = inlined_call_operand.hbm [shape: f32[128,128], index: 1, kind: input, shape index: {}]
  %s2 = inlined_call_operand.vmem [shape: f32[1,128], index: 2, kind: input, shape index: {}]
  %s3 = inlined_call_operand.hbm [shape: f32[16,128], index: 3, kind: output, shape index: {}]
  %s4 = sld [smem:[#allocation0]]
  $region30: #{tpu_custom_call.1} parent=0
    _
  %s6 = ssub.s32 1, %s4
  %s7 = scalar_select 0, %s6, %s4
  $region1: #{tpu_custom_call.1} parent=0
    #allocation2 [shape = 'u8[8192]{0}', space=vmem, size = 0x2000, scoped, tag = 'input window, operand 0, single buffered']
    #allocation3 [shape = 's32[1]{0}', space=sflag, size = 0x4, scoped, tag = 'scoped memory for tpu_custom_call.1']
    #allocation4 [shape = 's32[1]{0}', space=sflag, size = 0x4, scoped, tag = 'scoped memory for tpu_custom_call.1']
    #allocation5 [shape = 'u8[65536]{0}', space=vmem, size = 0x10000, scoped, tag = 'input window, operand 1, single buffered']
    #allocation6 [shape = 's32[1]{0}', space=sflag, size = 0x4, scoped, tag = 'scoped memory for tpu_custom_call.1']
    #allocation7 [shape = 'u8[8192]{0}', space=vmem, size = 0x2000, scoped, tag = 'output window, operand 0, single buffered']
    %8 = vsyncpa [#allocation3], 0
    %9 = vsyncpa [#allocation6], 0
    %10 = vsyncpa [#allocation4], 0
    // Predicated region
    $region2: #{tpu_custom_call.1} parent=1 // pred_check
      _
    $region3: #{tpu_custom_call.1} parent=1 // pred_check_branch
      %12 = sbr.rel (0) target = $region5
    $region4: #{tpu_custom_call.1} parent=1 // pred_region
      %s14 = ssub.s32 256, 256
      %15 = vsyncadd [#allocation3], %s14
      %s16 = sshll.u32 [#allocation2], 4
      %s17 = int_to_ptr.vmem [resolvable:$true] %s16
      %22 = dma.hbm_to_vmem [thread:$0]  %s0, 256, %s17, [#allocation3], 128, 128, 8
    $region5: #{tpu_custom_call.1} parent=1 // pred_fallthru
      _
    // Predicated region
    $region6: #{tpu_custom_call.1} parent=1 // pred_check
      _
    $region7: #{tpu_custom_call.1} parent=1 // pred_check_branch
      %24 = sbr.rel (0) target = $region9
    $region8: #{tpu_custom_call.1} parent=1 // pred_region
      %s26 = ssub.s32 2048, 2048
      %27 = vsyncadd [#allocation6], %s26
      %s28 = sshll.u32 [#allocation5], 4
      %s29 = int_to_ptr.vmem [resolvable:$true] %s28
      %34 = dma.hbm_to_vmem [thread:$0]  %s1, 2048, %s29, [#allocation6], 128, 128, 8
    $region9: #{tpu_custom_call.1} parent=1 // pred_fallthru
      _
    // Predicated region
    $region10: #{tpu_custom_call.1} parent=1 // pred_check
      _
    $region11: #{tpu_custom_call.1} parent=1 // pred_check_branch
      %36 = sbr.rel (0) target = $region13
    $region12: #{tpu_custom_call.1} parent=1 // pred_region
      _
    $region13: #{tpu_custom_call.1} parent=1 // pred_fallthru
      _
    // Predicated region
    $region14: #{tpu_custom_call.1} parent=1 // pred_check
      _
    $region15: #{tpu_custom_call.1} parent=1 // pred_check_branch
      %38 = sbr.rel (0) target = $region17
    $region16: #{tpu_custom_call.1} parent=1 // pred_region
      %39 = dma.done [#allocation3], 256
    $region17: #{tpu_custom_call.1} parent=1 // pred_fallthru
      _
    // Predicated region
    $region18: #{tpu_custom_call.1} parent=1 // pred_check
      _
    $region19: #{tpu_custom_call.1} parent=1 // pred_check_branch
      %41 = sbr.rel (0) target = $region21
    $region20: #{tpu_custom_call.1} parent=1 // pred_region
      %42 = dma.done [#allocation6], 2048
    $region21: #{tpu_custom_call.1} parent=1 // pred_fallthru
      _
    %v43 = vld [vmem:[#allocation2] sm:$0xff]
    %v44 = vld [vmem:[#allocation2 + $0x8] sm:$0xff]
    %v45 = vld [vmem:[#allocation5] sm:$0xff]
    %v46 = vld [vmem:[#allocation5 + $0x8] sm:$0xff]
    %v47 = vld [vmem:[#allocation5 + $0x10] sm:$0xff]
    %v48 = vld [vmem:[#allocation5 + $0x18] sm:$0xff]
    %v49 = vld [vmem:[#allocation5 + $0x20] sm:$0xff]
    %v50 = vld [vmem:[#allocation5 + $0x28] sm:$0xff]
    %v51 = vld [vmem:[#allocation5 + $0x30] sm:$0xff]
    %v52 = vld [vmem:[#allocation5 + $0x38] sm:$0xff]
    %v53 = vld [vmem:[#allocation5 + $0x40] sm:$0xff]
    %v54 = vld [vmem:[#allocation5 + $0x48] sm:$0xff]
    %v55 = vld [vmem:[#allocation5 + $0x50] sm:$0xff]
    %v56 = vld [vmem:[#allocation5 + $0x58] sm:$0xff]
    %v57 = vld [vmem:[#allocation5 + $0x60] sm:$0xff]
    %v58 = vld [vmem:[#allocation5 + $0x68] sm:$0xff]
    %v59 = vld [vmem:[#allocation5 + $0x70] sm:$0xff]
    %v60 = vld [vmem:[#allocation5 + $0x78] sm:$0xff]
    %v61 = vld [vmem:[%s2] sm:$0x1]
    %v63 = vlaneseq
    %v64 = vshrl.u32 %v63, 7
    %v65 = vsub.s32 0, %v64
    %v66 = vrot.slane %v61, %v65
    %68 = vmatprep.subr.mxu0 0.0
    %69 = vmatpush1.xpose.msra.mxu0 %v45
    %70 = vmatprep.subr.mxu0 0.0
    %71 = vmatpush1.xpose.msra.mxu0 %v46
    %72 = vmatprep.subr.mxu0 0.0
    %73 = vmatpush1.xpose.msra.mxu0 %v47
    %74 = vmatprep.subr.mxu0 0.0
    %75 = vmatpush1.xpose.msra.mxu0 %v48
    %76 = vmatprep.subr.mxu0 0.0
    %77 = vmatpush1.xpose.msra.mxu0 %v49
    %78 = vmatprep.subr.mxu0 0.0
    %79 = vmatpush1.xpose.msra.mxu0 %v50
    %80 = vmatprep.subr.mxu0 0.0
    %81 = vmatpush1.xpose.msra.mxu0 %v51
    %82 = vmatprep.subr.mxu0 0.0
    %83 = vmatpush1.xpose.msra.mxu0 %v52
    %84 = vmatprep.subr.mxu0 0.0
    %85 = vmatpush1.xpose.msra.mxu0 %v53
    %86 = vmatprep.subr.mxu0 0.0
    %87 = vmatpush1.xpose.msra.mxu0 %v54
    %88 = vmatprep.subr.mxu0 0.0
    %89 = vmatpush1.xpose.msra.mxu0 %v55
    %90 = vmatprep.subr.mxu0 0.0
    %91 = vmatpush1.xpose.msra.mxu0 %v56
    %92 = vmatprep.subr.mxu0 0.0
    %93 = vmatpush1.xpose.msra.mxu0 %v57
    %94 = vmatprep.subr.mxu0 0.0
    %95 = vmatpush1.xpose.msra.mxu0 %v58
    %96 = vmatprep.subr.mxu0 0.0
    %97 = vmatpush1.xpose.msra.mxu0 %v59
    %98 = vmatprep.subr.mxu0 0.0
    %99 = vmatpush1.xpose.msra.mxu0 %v60
    %100 = vmatprep.subr.mxu0 0.0
    %101 = vmatpush1.xpose.msra.mxu0 0.0
    %102 = vmatprep.subr.mxu0 0.0
    %103 = vmatpush1.xpose.msra.mxu0 0.0
    %104 = vmatprep.subr.mxu0 0.0
    %105 = vmatpush1.xpose.msra.mxu0 0.0
    %106 = vmatprep.subr.mxu0 0.0
    %107 = vmatpush1.xpose.msra.mxu0 0.0
    %108 = vmatprep.subr.mxu0 0.0
    %109 = vmatpush1.xpose.msra.mxu0 0.0
    %110 = vmatprep.subr.mxu0 0.0
    %111 = vmatpush1.xpose.msra.mxu0 0.0
    %112 = vmatprep.subr.mxu0 0.0
    %113 = vmatpush1.xpose.msra.mxu0 0.0
    %114 = vmatprep.subr.mxu0 0.0
    %115 = vmatpush1.xpose.msra.mxu0 0.0
    %116 = vmatprep.subr.mxu0 0.0
    %117 = vmatpush1.xpose.msra.mxu0 0.0
    %118 = vmatprep.subr.mxu0 0.0
    %119 = vmatpush1.xpose.msra.mxu0 0.0
    %120 = vmatprep.subr.mxu0 0.0
    %121 = vmatpush1.xpose.msra.mxu0 0.0
    %122 = vmatprep.subr.mxu0 0.0
    %123 = vmatpush1.xpose.msra.mxu0 0.0
    %124 = vmatprep.subr.mxu0 0.0
    %125 = vmatpush1.xpose.msra.mxu0 0.0
    %126 = vmatprep.subr.mxu0 0.0
    %127 = vmatpush1.xpose.msra.mxu0 0.0
    %128 = vmatprep.subr.mxu0 0.0
    %129 = vmatpush1.xpose.msra.mxu0 0.0
    %130 = vmatprep.subr.mxu0 0.0
    %131 = vmatpush1.xpose.msra.mxu0 0.0
    %132 = vmatprep.mubr.f32.mxu0 0.0
    %133 = vmatmul.mubr.f32.gmra.mrb[0].mxu0 %v43
    %v134 = vpop.f32.mrb[0].mxu0
    %v135 = vadd.f32 %v66, %v134
    %v136 = vpop.f32.mrb[0].mxu0
    %137 = vmatprep.mubr.f32.mxu0 0.0
    %138 = vmatmul.mubr.f32.gmra.mrb[0].mxu0 %v44
    %v139 = vpop.f32.mrb[0].mxu0
    %v140 = vadd.f32 %v66, %v139
    %v141 = vpop.f32.mrb[0].mxu0
    %142 = vdwg.mxu0
    %143 = vst [vmem:[#allocation7] sm:$0xff] %v135
    %144 = vst [vmem:[#allocation7 + $0x8] sm:$0xff] %v140
    // Predicated region
    $region22: #{tpu_custom_call.1} parent=1 // pred_check
      _
    $region23: #{tpu_custom_call.1} parent=1 // pred_check_branch
      %146 = sbr.rel (0) target = $region25
    $region24: #{tpu_custom_call.1} parent=1 // pred_region
      %s148 = ssub.s32 256, 256
      %149 = vsyncadd [#allocation4], %s148
      %s150 = sshll.u32 [#allocation7], 4
      %s151 = int_to_ptr.vmem [resolvable:$true] %s150
      %156 = dma.vmem_to_hbm [thread:$0]  %s151, 256, %s3, [#allocation4], 128, 128, 8
    $region25: #{tpu_custom_call.1} parent=1 // pred_fallthru
      _
    // Predicated region
    $region26: #{tpu_custom_call.1} parent=1 // pred_check
      _
    $region27: #{tpu_custom_call.1} parent=1 // pred_check_branch
      %158 = sbr.rel (0) target = $region29
    $region28: #{tpu_custom_call.1} parent=1 // pred_region
      %159 = dma.done [#allocation4], 256
    $region29: #{tpu_custom_call.1} parent=1 // pred_fallthru
      _
    %160 = vsyncpa [#allocation3], 1
    %161 = vsyncpa [#allocation6], 1
    %162 = vsyncpa [#allocation4], 1

</llo_original>
